<compile_context>
chip_gen: v7x
topology: tpu7x:2x2x1
jax: 0.10.0
libtpu: 0.0.40
codegen_flags: <defaults>
</compile_context>

<pallas_src>
import functools

import jax
import jax.numpy as jnp
from jax.experimental import pallas as pl
from jax.experimental.pallas import tpu as pltpu

HIDDEN_LAYER = 256
LOG_STD_MAX = 2.0
LOG_STD_MIN = -20.0

# Default batch tile.  At tb=1024 the double-buffered footprint (obs + bf16
# out + resident weights + bf16 intermediates) is ~2 MiB for typical dim_obs —
# far under every generation's scoped-VMEM default, so per-step overhead is
# amortized well into the HBM-roofline regime.
DEFAULT_BATCH_TILE = 1024


def _round_up(x, m):
    return ((x + m - 1) // m) * m


def _choose_batch_tile(B, batch_tile):
    """Pick the batch tile: big enough to amortize per-step overhead, small
    enough to avoid padded-row waste, and >=2 grid steps for mid/large B so
    both v7x TensorCores get work under dimension_semantics=('parallel',)."""
    b8 = _round_up(B, 8)
    if b8 <= batch_tile:
        if b8 > 256:
            # Split across (at least) two grid steps for megacore sharding.
            return _round_up((B + 1) // 2, 8)
        return b8
    # Large batch: ladder search.  Cost model: wasted padded rows plus a
    # per-grid-step overhead equivalent to a few tens of rows of work.
    best_tb, best_cost = 8, None
    for tb in (2048, 1024, 512, 256, 128, 64, 32, 16, 8):
        if tb > batch_tile:
            continue
        b_pad = _round_up(B, tb)
        cost = (b_pad - B) + 48 * (b_pad // tb)
        if best_cost is None or cost < best_cost:
            best_tb, best_cost = tb, cost
    return best_tb


def _pnetwork_kernel(obs_ref, w1_ref, b1_ref, w2_ref, b2_ref, w3_ref, b3_ref,
                     out_ref, *, dim_act):
    # Layer 1: cast obs to bf16 at the MXU boundary (f32 accumulation).
    x = obs_ref[...].astype(jnp.bfloat16)
    h = jnp.dot(x, w1_ref[...], preferred_element_type=jnp.float32)
    # Fused bias + ReLU + bf16 cast: keeps the inter-layer activation bf16
    # (identical math to casting at the next dot; halves spill/vst traffic).
    h = jnp.maximum(h + b1_ref[...], 0.0).astype(jnp.bfloat16)
    # Layer 2: Linear + ReLU.
    h = jnp.dot(h, w2_ref[...], preferred_element_type=jnp.float32)
    h = jnp.maximum(h + b2_ref[...], 0.0).astype(jnp.bfloat16)
    # Fused output head: single matmul over the (lane-padded) [mean | lstd]
    # weight; clamp only the log-std columns (== torch.chunk + clamp).
    out = jnp.dot(h, w3_ref[...], preferred_element_type=jnp.float32)
    out = out + b3_ref[...]
    col = jax.lax.broadcasted_iota(jnp.int32, out.shape, dimension=1)
    is_lstd = (col >= dim_act) & (col < 2 * dim_act)
    out_ref[...] = jnp.where(is_lstd,
                             jnp.clip(out, LOG_STD_MIN, LOG_STD_MAX),
                             out).astype(out_ref.dtype)


def prepare_pnetwork_params(params):
    """One-time parameter preprocessing: cast weights to bf16 and pad to
    lane/sublane alignment so the per-call wrapper does no work on params."""
    dim_obs, hidden = params["w1"].shape
    dim_act = params["b3"].shape[-1] // 2
    k_in = _round_up(dim_obs, 8)          # sublane-align first-matmul K
    n_pad = _round_up(2 * dim_act, 128)   # lane-dense output slab width
    prepped = dict(
        w1=jnp.pad(params["w1"].astype(jnp.bfloat16),
                   ((0, k_in - dim_obs), (0, 0))),
        b1=params["b1"].astype(jnp.float32).reshape(1, hidden),
        w2=params["w2"].astype(jnp.bfloat16),
        b2=params["b2"].astype(jnp.float32).reshape(1, hidden),
        w3=jnp.pad(params["w3"].astype(jnp.bfloat16),
                   ((0, 0), (0, n_pad - 2 * dim_act))),
        b3=jnp.pad(params["b3"].astype(jnp.float32).reshape(1, -1),
                   ((0, 0), (0, n_pad - 2 * dim_act))),
    )
    meta = dict(dim_obs=dim_obs, dim_act=dim_act, hidden=hidden,
                k_in=k_in, n_pad=n_pad)
    return prepped, meta


def pnetwork_forward(obs, prepped, meta, *, batch_tile=DEFAULT_BATCH_TILE):
    """PNetwork.forward.  Returns (mean, lstd), each [B, dim_act], f32."""
    B, dim_obs = obs.shape
    assert dim_obs == meta["dim_obs"]
    dim_act = meta["dim_act"]
    hidden = meta["hidden"]
    k_in = meta["k_in"]
    n_pad = meta["n_pad"]

    tb = _choose_batch_tile(B, batch_tile)
    b_pad = _round_up(B, tb)

    # Only touch obs if padding is actually required (zero-row / zero-col pad;
    # math unchanged since the matching w1 rows are zero).
    if (b_pad, k_in) != (B, dim_obs):
        obs = jnp.pad(obs, ((0, b_pad - B), (0, k_in - dim_obs)))

    grid = (b_pad // tb,)

    # Batch-tiled obs/out; weights & biases VMEM-resident (constant index_map).
    in_specs = [
        pl.BlockSpec((tb, k_in), lambda i: (i, 0)),         # obs (native width)
        pl.BlockSpec((k_in, hidden), lambda i: (0, 0)),     # w1
        pl.BlockSpec((1, hidden), lambda i: (0, 0)),        # b1
        pl.BlockSpec((hidden, hidden), lambda i: (0, 0)),   # w2
        pl.BlockSpec((1, hidden), lambda i: (0, 0)),        # b2
        pl.BlockSpec((hidden, n_pad), lambda i: (0, 0)),    # w3 (fused head)
        pl.BlockSpec((1, n_pad), lambda i: (0, 0)),         # b3
    ]
    out_spec = pl.BlockSpec((tb, n_pad), lambda i: (i, 0))

    out = pl.pallas_call(
        functools.partial(_pnetwork_kernel, dim_act=dim_act),
        grid=grid,
        in_specs=in_specs,
        out_specs=out_spec,
        out_shape=jax.ShapeDtypeStruct((b_pad, n_pad), jnp.bfloat16),
        compiler_params=pltpu.CompilerParams(
            dimension_semantics=("parallel",)),
    )(obs, prepped["w1"], prepped["b1"], prepped["w2"], prepped["b2"],
      prepped["w3"], prepped["b3"])

    # Tiny slices; re-widen to f32 for downstream SAC math.
    mean = out[:B, :dim_act].astype(jnp.float32)
    lstd = out[:B, dim_act:2 * dim_act].astype(jnp.float32)
    return mean, lstd


# ----------------------------- init / reference -----------------------------

def _xavier_uniform(key, fan_in, fan_out):
    # nn.init.xavier_uniform_ with gain=1; generated directly as [in, out]
    # (symmetric in fan_in/fan_out, so the distribution is identical).
    bound = jnp.sqrt(6.0 / (fan_in + fan_out))
    return jax.random.uniform(key, (fan_in, fan_out), jnp.float32,
                              minval=-bound, maxval=bound)


def init_pnetwork_params(key, dim_obs, dim_act, hidden=HIDDEN_LAYER):
    k1, k2, k3 = jax.random.split(key, 3)
    return dict(
        w1=_xavier_uniform(k1, dim_obs, hidden),
        b1=jnp.zeros((1, hidden), jnp.float32),
        w2=_xavier_uniform(k2, hidden, hidden),
        b2=jnp.zeros((1, hidden), jnp.float32),
        w3=_xavier_uniform(k3, hidden, 2 * dim_act),   # unsplit head
        b3=jnp.zeros((1, 2 * dim_act), jnp.float32),
    )


def _reference_forward_bf16(obs, p):
    # Same math as the kernel: bf16 MXU operands, f32 accumulation, bf16
    # inter-layer activations, bf16 output slab.
    dim_act = p["b3"].shape[-1] // 2
    h = jnp.dot(obs.astype(jnp.bfloat16), p["w1"].astype(jnp.bfloat16),
                preferred_element_type=jnp.float32)
    h = jnp.maximum(h + p["b1"], 0.0).astype(jnp.bfloat16)
    h = jnp.dot(h, p["w2"].astype(jnp.bfloat16),
                preferred_element_type=jnp.float32)
    h = jnp.maximum(h + p["b2"], 0.0).astype(jnp.bfloat16)
    out = jnp.dot(h, p["w3"].astype(jnp.bfloat16),
                  preferred_element_type=jnp.float32) + p["b3"]
    mean = out[:, :dim_act]
    lstd = jnp.clip(out[:, dim_act:], LOG_STD_MIN, LOG_STD_MAX)
    return (mean.astype(jnp.bfloat16).astype(jnp.float32),
            lstd.astype(jnp.bfloat16).astype(jnp.float32))


def _reference_forward_f32(obs, p):
    dim_act = p["b3"].shape[-1] // 2
    h = jnp.maximum(obs @ p["w1"] + p["b1"], 0.0)
    h = jnp.maximum(h @ p["w2"] + p["b2"], 0.0)
    out = h @ p["w3"] + p["b3"]
    mean = out[:, :dim_act]
    lstd = jnp.clip(out[:, dim_act:], LOG_STD_MIN, LOG_STD_MAX)
    return mean, lstd


if __name__ == "__main__":
    key = jax.random.PRNGKey(0)
    k_params, k_obs = jax.random.split(key)

    B, DIM_OBS, DIM_ACT = 8, 16, 4
    params = init_pnetwork_params(k_params, DIM_OBS, DIM_ACT)
    obs = jax.random.normal(k_obs, (B, DIM_OBS), jnp.float32)

    prepped, meta = prepare_pnetwork_params(params)   # one-time prep
    mean, lstd = pnetwork_forward(obs, prepped, meta)
    jax.block_until_ready((mean, lstd))
    assert mean.shape == (B, DIM_ACT) and lstd.shape == (B, DIM_ACT)

    # Check against a bf16-matched reference (same math/quantization as the
    # kernel; tolerance covers 1-ULP bf16 / accumulation-order differences).
    mean_bf, lstd_bf = _reference_forward_bf16(obs, params)
    assert jnp.allclose(mean, mean_bf, atol=2e-2, rtol=2e-2)
    assert jnp.allclose(lstd, lstd_bf, atol=2e-2, rtol=2e-2)

    # Looser check against the pure-f32 PyTorch-equivalent math (bf16 MXU
    # operands + bf16 output slab introduce ~1e-2 relative error worst case).
    mean_f32, lstd_f32 = _reference_forward_f32(obs, params)
    assert jnp.allclose(mean, mean_f32, atol=5e-2, rtol=5e-2)
    assert jnp.allclose(lstd, lstd_f32, atol=5e-2, rtol=5e-2)

    # TODO(synk): PNetwork.sample() (Normal rsample + tanh squash + log-prob)
    # is not part of forward(); only forward() is implemented in the kernel.
    print("KERNEL_OK")
</pallas_src>

<mosaic_0001>
module attributes {stable_mosaic.version = 11 : i64} {
  func.func @_pnetwork_kernel(%arg0: i32, %arg1: memref<8x16xf32, #tpu.memory_space<vmem>>, %arg2: memref<16x256xbf16, #tpu.memory_space<vmem>>, %arg3: memref<1x256xf32, #tpu.memory_space<vmem>>, %arg4: memref<256x256xbf16, #tpu.memory_space<vmem>>, %arg5: memref<1x256xf32, #tpu.memory_space<vmem>>, %arg6: memref<256x128xbf16, #tpu.memory_space<vmem>>, %arg7: memref<1x128xf32, #tpu.memory_space<vmem>>, %arg8: memref<8x128xbf16, #tpu.memory_space<vmem>>) attributes {dimension_semantics = [#tpu.dimension_semantics<parallel>], iteration_bounds = array<i64: 1>, scalar_prefetch = 0 : i64, scratch_operands = 0 : i64, tpu.core_type = #tpu.core_type<tc>, window_params = [{transform_indices = @transform_0, window_bounds = array<i64: 8, 16>}, {pipeline_mode = #tpu.pipeline_mode<synchronous>, transform_indices = @transform_1, window_bounds = array<i64: 16, 256>}, {pipeline_mode = #tpu.pipeline_mode<synchronous>, transform_indices = @transform_2, window_bounds = array<i64: 1, 256>}, {pipeline_mode = #tpu.pipeline_mode<synchronous>, transform_indices = @transform_3, window_bounds = array<i64: 256, 256>}, {pipeline_mode = #tpu.pipeline_mode<synchronous>, transform_indices = @transform_4, window_bounds = array<i64: 1, 256>}, {pipeline_mode = #tpu.pipeline_mode<synchronous>, transform_indices = @transform_5, window_bounds = array<i64: 256, 128>}, {pipeline_mode = #tpu.pipeline_mode<synchronous>, transform_indices = @transform_6, window_bounds = array<i64: 1, 128>}, {transform_indices = @transform_7, window_bounds = array<i64: 8, 128>}]} {
    %c0 = arith.constant 0 : index
    %c0_0 = arith.constant 0 : index
    %0 = vector.load %arg1[%c0, %c0_0] : memref<8x16xf32, #tpu.memory_space<vmem>>, vector<8x16xf32>
    %1 = arith.truncf %0 : vector<8x16xf32> to vector<8x16xbf16>
    %c0_1 = arith.constant 0 : index
    %c0_2 = arith.constant 0 : index
    %2 = vector.load %arg2[%c0_1, %c0_2] : memref<16x256xbf16, #tpu.memory_space<vmem>>, vector<16x256xbf16>
    %cst = arith.constant dense<0.000000e+00> : vector<8x256xf32>
    %3 = tpu.matmul %1, %2, %cst {dimension_numbers = #tpu.dot_dimension_numbers<[1], [0], [0], [1], [0, 0, 1, 1], [], []>} : vector<8x16xbf16>, vector<16x256xbf16>, vector<8x256xf32> -> vector<8x256xf32>
    %c0_3 = arith.constant 0 : index
    %c0_4 = arith.constant 0 : index
    %4 = vector.load %arg3[%c0_3, %c0_4] : memref<1x256xf32, #tpu.memory_space<vmem>>, vector<1x256xf32>
    %5 = vector.broadcast %4 : vector<1x256xf32> to vector<8x256xf32>
    %6 = arith.addf %3, %5 : vector<8x256xf32>
    %cst_5 = arith.constant 0.000000e+00 : f32
    %7 = vector.broadcast %cst_5 : f32 to vector<8x256xf32>
    %8 = arith.maximumf %6, %7 : vector<8x256xf32>
    %9 = arith.truncf %8 : vector<8x256xf32> to vector<8x256xbf16>
    %c0_6 = arith.constant 0 : index
    %c0_7 = arith.constant 0 : index
    %10 = vector.load %arg4[%c0_6, %c0_7] : memref<256x256xbf16, #tpu.memory_space<vmem>>, vector<256x256xbf16>
    %cst_8 = arith.constant dense<0.000000e+00> : vector<8x256xf32>
    %11 = tpu.matmul %9, %10, %cst_8 {dimension_numbers = #tpu.dot_dimension_numbers<[1], [0], [0], [1], [0, 0, 1, 1], [], []>} : vector<8x256xbf16>, vector<256x256xbf16>, vector<8x256xf32> -> vector<8x256xf32>
    %c0_9 = arith.constant 0 : index
    %c0_10 = arith.constant 0 : index
    %12 = vector.load %arg5[%c0_9, %c0_10] : memref<1x256xf32, #tpu.memory_space<vmem>>, vector<1x256xf32>
    %13 = vector.broadcast %12 : vector<1x256xf32> to vector<8x256xf32>
    %14 = arith.addf %11, %13 : vector<8x256xf32>
    %cst_11 = arith.constant 0.000000e+00 : f32
    %15 = vector.broadcast %cst_11 : f32 to vector<8x256xf32>
    %16 = arith.maximumf %14, %15 : vector<8x256xf32>
    %17 = arith.truncf %16 : vector<8x256xf32> to vector<8x256xbf16>
    %c0_12 = arith.constant 0 : index
    %c0_13 = arith.constant 0 : index
    %18 = vector.load %arg6[%c0_12, %c0_13] : memref<256x128xbf16, #tpu.memory_space<vmem>>, vector<256x128xbf16>
    %cst_14 = arith.constant dense<0.000000e+00> : vector<8x128xf32>
    %19 = tpu.matmul %17, %18, %cst_14 {dimension_numbers = #tpu.dot_dimension_numbers<[1], [0], [0], [1], [0, 0, 1, 1], [], []>} : vector<8x256xbf16>, vector<256x128xbf16>, vector<8x128xf32> -> vector<8x128xf32>
    %c0_15 = arith.constant 0 : index
    %c0_16 = arith.constant 0 : index
    %20 = vector.load %arg7[%c0_15, %c0_16] : memref<1x128xf32, #tpu.memory_space<vmem>>, vector<1x128xf32>
    %21 = vector.broadcast %20 : vector<1x128xf32> to vector<8x128xf32>
    %22 = arith.addf %19, %21 : vector<8x128xf32>
    %23 = tpu.iota {dimensions = array<i32: 1>} : vector<8x128xi32>
    %c4_i32 = arith.constant 4 : i32
    %24 = vector.broadcast %c4_i32 : i32 to vector<8x128xi32>
    %25 = arith.cmpi sge, %23, %24 : vector<8x128xi32>
    %c8_i32 = arith.constant 8 : i32
    %26 = vector.broadcast %c8_i32 : i32 to vector<8x128xi32>
    %27 = arith.cmpi slt, %23, %26 : vector<8x128xi32>
    %28 = arith.andi %25, %27 : vector<8x128xi1>
    %cst_17 = arith.constant -2.000000e+01 : f32
    %cst_18 = arith.constant 2.000000e+00 : f32
    %29 = vector.broadcast %cst_17 : f32 to vector<8x128xf32>
    %30 = arith.maximumf %29, %22 : vector<8x128xf32>
    %31 = vector.broadcast %cst_18 : f32 to vector<8x128xf32>
    %32 = arith.minimumf %31, %30 : vector<8x128xf32>
    %33 = arith.select %28, %32, %22 : vector<8x128xi1>, vector<8x128xf32>
    %34 = arith.truncf %33 : vector<8x128xf32> to vector<8x128xbf16>
    %c0_19 = arith.constant 0 : index
    %c0_20 = arith.constant 0 : index
    %35 = vector.load %arg8[%c0_19, %c0_20] : memref<8x128xbf16, #tpu.memory_space<vmem>>, vector<8x128xbf16>
    tpu.vector_store %arg8[%c0_19, %c0_20], %34 {strides = array<i32>} : memref<8x128xbf16, #tpu.memory_space<vmem>>, vector<8x128xbf16>,
    return
  }
  func.func @transform_0(%arg0: i32) -> (i32, i32) {
    %c0_i32 = arith.constant 0 : i32
    %c0_i32_0 = arith.constant 0 : i32
    return %arg0, %c0_i32 : i32, i32
  }
  func.func @transform_1(%arg0: i32) -> (i32, i32) {
    %c0_i32 = arith.constant 0 : i32
    %c0_i32_0 = arith.constant 0 : i32
    %c0_i32_1 = arith.constant 0 : i32
    return %c0_i32, %c0_i32_0 : i32, i32
  }
  func.func @transform_2(%arg0: i32) -> (i32, i32) {
    %c0_i32 = arith.constant 0 : i32
    %c0_i32_0 = arith.constant 0 : i32
    %c0_i32_1 = arith.constant 0 : i32
    return %c0_i32, %c0_i32_0 : i32, i32
  }
  func.func @transform_3(%arg0: i32) -> (i32, i32) {
    %c0_i32 = arith.constant 0 : i32
    %c0_i32_0 = arith.constant 0 : i32
    %c0_i32_1 = arith.constant 0 : i32
    return %c0_i32, %c0_i32_0 : i32, i32
  }
  func.func @transform_4(%arg0: i32) -> (i32, i32) {
    %c0_i32 = arith.constant 0 : i32
    %c0_i32_0 = arith.constant 0 : i32
    %c0_i32_1 = arith.constant 0 : i32
    return %c0_i32, %c0_i32_0 : i32, i32
  }
  func.func @transform_5(%arg0: i32) -> (i32, i32) {
    %c0_i32 = arith.constant 0 : i32
    %c0_i32_0 = arith.constant 0 : i32
    %c0_i32_1 = arith.constant 0 : i32
    return %c0_i32, %c0_i32_0 : i32, i32
  }
  func.func @transform_6(%arg0: i32) -> (i32, i32) {
    %c0_i32 = arith.constant 0 : i32
    %c0_i32_0 = arith.constant 0 : i32
    %c0_i32_1 = arith.constant 0 : i32
    return %c0_i32, %c0_i32_0 : i32, i32
  }
  func.func @transform_7(%arg0: i32) -> (i32, i32) {
    %c0_i32 = arith.constant 0 : i32
    %c0_i32_0 = arith.constant 0 : i32
    return %arg0, %c0_i32 : i32, i32
  }
}

</mosaic_0001>

<llo_original>
// kernel: tpu_custom_call.1
$region0: #{tpu_custom_call.1}
  #allocation0 [shape = 'u32[]', space=smem, size = 0x4, offset = 0x4, fixed_abs, tag = 'smem constant byte address 0x4 - core index']
  #allocation1 [shape = 'u32[144,128]{1,0:T(1,128)}', space=vmem, size = 0x12000, scoped, tag = 'internal scratch']
  %s0 = inlined_call_operand.hbm [shape: f32[8,16], index: 0, kind: input, shape index: {}]
  %s1 = inlined_call_operand.hbm [shape: bf16[16,256], index: 1, kind: input, shape index: {}]
  %s2 = inlined_call_operand.vmem [shape: f32[1,256], index: 2, kind: input, shape index: {}]
  %s3 = inlined_call_operand.hbm [shape: bf16[256,256], index: 3, kind: input, shape index: {}]
  %s4 = inlined_call_operand.vmem [shape: f32[1,256], index: 4, kind: input, shape index: {}]
  %s5 = inlined_call_operand.hbm [shape: bf16[256,128], index: 5, kind: input, shape index: {}]
  %s6 = inlined_call_operand.vmem [shape: f32[1,128], index: 6, kind: input, shape index: {}]
  %s7 = inlined_call_operand.hbm [shape: bf16[8,128], index: 7, kind: output, shape index: {}]
  %s8 = sld [smem:[#allocation0]]
  $region54: #{tpu_custom_call.1} parent=0
    _
  %s10 = ssub.s32 1, %s8
  %s11 = scalar_select 0, %s10, %s8
  $region1: #{tpu_custom_call.1} parent=0
    #allocation2 [shape = 'u8[4096]{0}', space=vmem, size = 0x1000, scoped, tag = 'input window, operand 0, single buffered']
    #allocation3 [shape = 's32[1]{0}', space=sflag, size = 0x4, scoped, tag = 'scoped memory for tpu_custom_call.1']
    #allocation4 [shape = 's32[1]{0}', space=sflag, size = 0x4, scoped, tag = 'scoped memory for tpu_custom_call.1']
    #allocation5 [shape = 'u8[8192]{0}', space=vmem, size = 0x2000, scoped, tag = 'input window, operand 1, single buffered']
    #allocation6 [shape = 's32[1]{0}', space=sflag, size = 0x4, scoped, tag = 'scoped memory for tpu_custom_call.1']
    #allocation7 [shape = 'u8[131072]{0}', space=vmem, size = 0x20000, scoped, tag = 'input window, operand 3, single buffered']
    #allocation8 [shape = 'u8[65536]{0}', space=vmem, size = 0x10000, scoped, tag = 'input window, operand 5, single buffered']
    #allocation9 [shape = 's32[1]{0}', space=sflag, size = 0x4, scoped, tag = 'scoped memory for tpu_custom_call.1']
    #allocation10 [shape = 'u8[2048]{0}', space=vmem, size = 0x800, scoped, tag = 'output window, operand 0, single buffered']
    %12 = vsyncpa [#allocation3], 0
    %13 = vsyncpa [#allocation6], 0
    %14 = vsyncpa [#allocation9], 0
    %15 = vsyncpa [#allocation4], 0
    // Predicated region
    $region2: #{tpu_custom_call.1} parent=1 // pred_check
      _
    $region3: #{tpu_custom_call.1} parent=1 // pred_check_branch
      %17 = sbr.rel (0) target = $region5
    $region4: #{tpu_custom_call.1} parent=1 // pred_region
      %s19 = ssub.s32 128, 128
      %20 = vsyncadd [#allocation3], %s19
      %s22 = sshll.u32 [#allocation2], 4
      %s23 = int_to_ptr.vmem [resolvable:$true] %s22
      %25 = dma.hbm_to_vmem [thread:$0]  %s0, 128, %s23, [#allocation3]
    $region5: #{tpu_custom_call.1} parent=1 // pred_fallthru
      _
    // Predicated region
    $region6: #{tpu_custom_call.1} parent=1 // pred_check
      _
    $region7: #{tpu_custom_call.1} parent=1 // pred_check_branch
      %27 = sbr.rel (0) target = $region9
    $region8: #{tpu_custom_call.1} parent=1 // pred_region
      %s29 = ssub.s32 256, 256
      %30 = vsyncadd [#allocation6], %s29
      %s31 = sshll.u32 [#allocation5], 4
      %s32 = int_to_ptr.vmem [resolvable:$true] %s31
      %37 = dma.hbm_to_vmem [thread:$0]  %s1, 256, %s32, [#allocation6], 128, 128, 8
    $region9: #{tpu_custom_call.1} parent=1 // pred_fallthru
      _
    // Predicated region
    $region10: #{tpu_custom_call.1} parent=1 // pred_check
      _
    $region11: #{tpu_custom_call.1} parent=1 // pred_check_branch
      %39 = sbr.rel (0) target = $region13
    $region12: #{tpu_custom_call.1} parent=1 // pred_region
      _
    $region13: #{tpu_custom_call.1} parent=1 // pred_fallthru
      _
    // Predicated region
    $region14: #{tpu_custom_call.1} parent=1 // pred_check
      _
    $region15: #{tpu_custom_call.1} parent=1 // pred_check_branch
      %41 = sbr.rel (0) target = $region17
    $region16: #{tpu_custom_call.1} parent=1 // pred_region
      %s43 = ssub.s32 4096, 4096
      %44 = vsyncadd [#allocation6], %s43
      %s45 = sshll.u32 [#allocation7], 4
      %s46 = int_to_ptr.vmem [resolvable:$true] %s45
      %51 = dma.hbm_to_vmem [thread:$0]  %s3, 4096, %s46, [#allocation6], 128, 128, 8
    $region17: #{tpu_custom_call.1} parent=1 // pred_fallthru
      _
    // Predicated region
    $region18: #{tpu_custom_call.1} parent=1 // pred_check
      _
    $region19: #{tpu_custom_call.1} parent=1 // pred_check_branch
      %53 = sbr.rel (0) target = $region21
    $region20: #{tpu_custom_call.1} parent=1 // pred_region
      _
    $region21: #{tpu_custom_call.1} parent=1 // pred_fallthru
      _
    // Predicated region
    $region22: #{tpu_custom_call.1} parent=1 // pred_check
      _
    $region23: #{tpu_custom_call.1} parent=1 // pred_check_branch
      %55 = sbr.rel (0) target = $region25
    $region24: #{tpu_custom_call.1} parent=1 // pred_region
      %s57 = ssub.s32 2048, 2048
      %58 = vsyncadd [#allocation9], %s57
      %s59 = sshll.u32 [#allocation8], 4
      %s60 = int_to_ptr.vmem [resolvable:$true] %s59
      %65 = dma.hbm_to_vmem [thread:$0]  %s5, 2048, %s60, [#allocation9], 64, 64, 4
    $region25: #{tpu_custom_call.1} parent=1 // pred_fallthru
      _
    // Predicated region
    $region26: #{tpu_custom_call.1} parent=1 // pred_check
      _
    $region27: #{tpu_custom_call.1} parent=1 // pred_check_branch
      %67 = sbr.rel (0) target = $region29
    $region28: #{tpu_custom_call.1} parent=1 // pred_region
      _
    $region29: #{tpu_custom_call.1} parent=1 // pred_fallthru
      _
    // Predicated region
    $region30: #{tpu_custom_call.1} parent=1 // pred_check
      _
    $region31: #{tpu_custom_call.1} parent=1 // pred_check_branch
      %69 = sbr.rel (0) target = $region33
    $region32: #{tpu_custom_call.1} parent=1 // pred_region
      %70 = dma.done [#allocation3], 128
    $region33: #{tpu_custom_call.1} parent=1 // pred_fallthru
      _
    // Predicated region
    $region34: #{tpu_custom_call.1} parent=1 // pred_check
      _
    $region35: #{tpu_custom_call.1} parent=1 // pred_check_branch
      %72 = sbr.rel (0) target = $region37
    $region36: #{tpu_custom_call.1} parent=1 // pred_region
      %73 = dma.done [#allocation6], 256
    $region37: #{tpu_custom_call.1} parent=1 // pred_fallthru
      _
    // Predicated region
    $region38: #{tpu_custom_call.1} parent=1 // pred_check
      _
    $region39: #{tpu_custom_call.1} parent=1 // pred_check_branch
      %75 = sbr.rel (0) target = $region41
    $region40: #{tpu_custom_call.1} parent=1 // pred_region
      %76 = dma.done [#allocation6], 4096
    $region41: #{tpu_custom_call.1} parent=1 // pred_fallthru
      _
    // Predicated region
    $region42: #{tpu_custom_call.1} parent=1 // pred_check
      _
    $region43: #{tpu_custom_call.1} parent=1 // pred_check_branch
      %78 = sbr.rel (0) target = $region45
    $region44: #{tpu_custom_call.1} parent=1 // pred_region
      %79 = dma.done [#allocation9], 2048
    $region45: #{tpu_custom_call.1} parent=1 // pred_fallthru
      _
    %v81 = vld [vmem:[#allocation2] sm:$0xff]
    %v82 = vpack.c.bf16 %v81, %v81
    %v83 = vld [vmem:[#allocation5] sm:$0xff]
    %v84 = vld [vmem:[#allocation5 + $0x8] sm:$0xff]
    %v85 = vld [vmem:[%s2] sm:$0x3]
    %v87 = vlaneseq
    %v88 = vshrl.u32 %v87, 7
    %v89 = vsub.s32 0, %v88
    %v90 = vrot.slane %v85, %v89
    %v91 = vlaneseq
    %v92 = vshrl.u32 %v91, 7
    %v93 = vsub.s32 1, %v92
    %v94 = vrot.slane %v85, %v93
    %v99 = vunpack.c.l.b16 %v83
    %v100 = vunpack.c.h.b16 %v83
    %v101 = vunpack.c.l.b16 %v84
    %v102 = vunpack.c.h.b16 %v84
    %v103 = vpack.c.b16 %v101, %v99
    %v104 = vpack.c.b16 %v102, %v100
    %vm107 = vcmask 130048
    %v109 = vsel %vm107, %v82, 0
    %111 = vmatprep.subr.bf16.mxu0 %v104
    %112 = vmatpush1.bf16.msra.mxu0 %v103
    %113 = vmatprep.subr.bf16.mxu0 0
    %114 = vmatpush1.bf16.msra.mxu0 0
    %115 = vmatprep.subr.bf16.mxu0 0
    %116 = vmatpush1.bf16.msra.mxu0 0
    %117 = vmatprep.subr.bf16.mxu0 0
    %118 = vmatpush1.bf16.msra.mxu0 0
    %119 = vmatprep.subr.bf16.mxu0 0
    %120 = vmatpush1.bf16.msra.mxu0 0
    %121 = vmatprep.subr.bf16.mxu0 0
    %122 = vmatpush1.bf16.msra.mxu0 0
    %123 = vmatprep.subr.bf16.mxu0 0
    %124 = vmatpush1.bf16.msra.mxu0 0
    %125 = vmatprep.subr.bf16.mxu0 0
    %126 = vmatpush1.bf16.msra.mxu0 0
    %127 = vmatprep.subr.bf16.mxu0 0
    %128 = vmatpush1.bf16.msra.mxu0 0
    %129 = vmatprep.subr.bf16.mxu0 0
    %130 = vmatpush1.bf16.msra.mxu0 0
    %131 = vmatprep.subr.bf16.mxu0 0
    %132 = vmatpush1.bf16.msra.mxu0 0
    %133 = vmatprep.subr.bf16.mxu0 0
    %134 = vmatpush1.bf16.msra.mxu0 0
    %135 = vmatprep.subr.bf16.mxu0 0
    %136 = vmatpush1.bf16.msra.mxu0 0
    %137 = vmatprep.subr.bf16.mxu0 0
    %138 = vmatpush1.bf16.msra.mxu0 0
    %139 = vmatprep.subr.bf16.mxu0 0
    %140 = vmatpush1.bf16.msra.mxu0 0
    %141 = vmatprep.subr.bf16.mxu0 0
    %142 = vmatpush1.bf16.msra.mxu0 0
    %143 = vmatprep.mubr.bf16.mxu0 0
    %144 = vmatmul.mubr.bf16.gmra.mrb[0].mxu0 %v109
    %v145 = vpop.f32.mrb[0].mxu0
    %v146 = vadd.f32 %v90, %v145
    %v147 = vpop.f32.mrb[0].mxu0
    %v148 = vadd.f32 %v94, %v147
    %v149 = vpop.f32.mrb[0].mxu0
    %v150 = vpop.f32.mrb[0].mxu0
    %151 = vdwg.mxu0
    %v152 = vmax.f32 %v146, 0.0
    %v153 = vmax.f32 %v148, 0.0
    %v154 = vpack.c.bf16 %v152, %v152
    %v155 = vpack.c.bf16 %v153, %v153
    %v156 = vld [vmem:[#allocation7] sm:$0xff]
    %v157 = vld [vmem:[#allocation7 + $0x8] sm:$0xff]
    %v158 = vld [vmem:[#allocation7 + $0x10] sm:$0xff]
    %v159 = vld [vmem:[#allocation7 + $0x18] sm:$0xff]
    %v160 = vld [vmem:[#allocation7 + $0x20] sm:$0xff]
    %v161 = vld [vmem:[#allocation7 + $0x28] sm:$0xff]
    %v162 = vld [vmem:[#allocation7 + $0x30] sm:$0xff]
    %v163 = vld [vmem:[#allocation7 + $0x38] sm:$0xff]
    %v164 = vld [vmem:[#allocation7 + $0x40] sm:$0xff]
    %v165 = vld [vmem:[#allocation7 + $0x48] sm:$0xff]
    %v166 = vld [vmem:[#allocation7 + $0x50] sm:$0xff]
    %v167 = vld [vmem:[#allocation7 + $0x58] sm:$0xff]
    %v168 = vld [vmem:[#allocation7 + $0x60] sm:$0xff]
    %v169 = vld [vmem:[#allocation7 + $0x68] sm:$0xff]
    %v170 = vld [vmem:[#allocation7 + $0x70] sm:$0xff]
    %v171 = vld [vmem:[#allocation7 + $0x78] sm:$0xff]
    %v172 = vld [vmem:[#allocation7 + $0x80] sm:$0xff]
    %v173 = vld [vmem:[#allocation7 + $0x88] sm:$0xff]
    %v174 = vld [vmem:[#allocation7 + $0x90] sm:$0xff]
    %v175 = vld [vmem:[#allocation7 + $0x98] sm:$0xff]
    %v176 = vld [vmem:[#allocation7 + $0xa0] sm:$0xff]
    %v177 = vld [vmem:[#allocation7 + $0xa8] sm:$0xff]
    %v178 = vld [vmem:[#allocation7 + $0xb0] sm:$0xff]
    %v179 = vld [vmem:[#allocation7 + $0xb8] sm:$0xff]
    %v180 = vld [vmem:[#allocation7 + $0xc0] sm:$0xff]
    %v181 = vld [vmem:[#allocation7 + $0xc8] sm:$0xff]
    %v182 = vld [vmem:[#allocation7 + $0xd0] sm:$0xff]
    %v183 = vld [vmem:[#allocation7 + $0xd8] sm:$0xff]
    %v184 = vld [vmem:[#allocation7 + $0xe0] sm:$0xff]
    %v185 = vld [vmem:[#allocation7 + $0xe8] sm:$0xff]
    %v186 = vld [vmem:[#allocation7 + $0xf0] sm:$0xff]
    %v187 = vld [vmem:[#allocation7 + $0xf8] sm:$0xff]
    %v188 = vld [vmem:[%s4] sm:$0x3]
    %v190 = vlaneseq
    %v191 = vshrl.u32 %v190, 7
    %v192 = vsub.s32 0, %v191
    %v193 = vrot.slane %v188, %v192
    %v194 = vlaneseq
    %v195 = vshrl.u32 %v194, 7
    %v196 = vsub.s32 1, %v195
    %v197 = vrot.slane %v188, %v196
    %v232 = vunpack.c.l.b16 %v156
    %v233 = vunpack.c.h.b16 %v156
    %v234 = vunpack.c.l.b16 %v157
    %v235 = vunpack.c.h.b16 %v157
    %v236 = vunpack.c.l.b16 %v158
    %v237 = vunpack.c.h.b16 %v158
    %v238 = vunpack.c.l.b16 %v159
    %v239 = vunpack.c.h.b16 %v159
    %v240 = vunpack.c.l.b16 %v160
    %v241 = vunpack.c.h.b16 %v160
    %v242 = vunpack.c.l.b16 %v161
    %v243 = vunpack.c.h.b16 %v161
    %v244 = vunpack.c.l.b16 %v162
    %v245 = vunpack.c.h.b16 %v162
    %v246 = vunpack.c.l.b16 %v163
    %v247 = vunpack.c.h.b16 %v163
    %v248 = vunpack.c.l.b16 %v164
    %v249 = vunpack.c.h.b16 %v164
    %v250 = vunpack.c.l.b16 %v165
    %v251 = vunpack.c.h.b16 %v165
    %v252 = vunpack.c.l.b16 %v166
    %v253 = vunpack.c.h.b16 %v166
    %v254 = vunpack.c.l.b16 %v167
    %v255 = vunpack.c.h.b16 %v167
    %v256 = vunpack.c.l.b16 %v168
    %v257 = vunpack.c.h.b16 %v168
    %v258 = vunpack.c.l.b16 %v169
    %v259 = vunpack.c.h.b16 %v169
    %v260 = vunpack.c.l.b16 %v170
    %v261 = vunpack.c.h.b16 %v170
    %v262 = vunpack.c.l.b16 %v171
    %v263 = vunpack.c.h.b16 %v171
    %v264 = vunpack.c.l.b16 %v172
    %v265 = vunpack.c.h.b16 %v172
    %v266 = vunpack.c.l.b16 %v173
    %v267 = vunpack.c.h.b16 %v173
    %v268 = vunpack.c.l.b16 %v174
    %v269 = vunpack.c.h.b16 %v174
    %v270 = vunpack.c.l.b16 %v175
    %v271 = vunpack.c.h.b16 %v175
    %v272 = vunpack.c.l.b16 %v176
    %v273 = vunpack.c.h.b16 %v176
    %v274 = vunpack.c.l.b16 %v177
    %v275 = vunpack.c.h.b16 %v177
    %v276 = vunpack.c.l.b16 %v178
    %v277 = vunpack.c.h.b16 %v178
    %v278 = vunpack.c.l.b16 %v179
    %v279 = vunpack.c.h.b16 %v179
    %v280 = vunpack.c.l.b16 %v180
    %v281 = vunpack.c.h.b16 %v180
    %v282 = vunpack.c.l.b16 %v181
    %v283 = vunpack.c.h.b16 %v181
    %v284 = vunpack.c.l.b16 %v182
    %v285 = vunpack.c.h.b16 %v182
    %v286 = vunpack.c.l.b16 %v183
    %v287 = vunpack.c.h.b16 %v183
    %v288 = vunpack.c.l.b16 %v184
    %v289 = vunpack.c.h.b16 %v184
    %v290 = vunpack.c.l.b16 %v185
    %v291 = vunpack.c.h.b16 %v185
    %v292 = vunpack.c.l.b16 %v186
    %v293 = vunpack.c.h.b16 %v186
    %v294 = vunpack.c.l.b16 %v187
    %v295 = vunpack.c.h.b16 %v187
    %v296 = vpack.c.b16 %v234, %v232
    %v297 = vpack.c.b16 %v235, %v233
    %v298 = vpack.c.b16 %v238, %v236
    %v299 = vpack.c.b16 %v239, %v237
    %v300 = vpack.c.b16 %v242, %v240
    %v301 = vpack.c.b16 %v243, %v241
    %v302 = vpack.c.b16 %v246, %v244
    %v303 = vpack.c.b16 %v247, %v245
    %v304 = vpack.c.b16 %v250, %v248
    %v305 = vpack.c.b16 %v251, %v249
    %v306 = vpack.c.b16 %v254, %v252
    %v307 = vpack.c.b16 %v255, %v253
    %v308 = vpack.c.b16 %v258, %v256
    %v309 = vpack.c.b16 %v259, %v257
    %v310 = vpack.c.b16 %v262, %v260
    %v311 = vpack.c.b16 %v263, %v261
    %v312 = vpack.c.b16 %v266, %v264
    %v313 = vpack.c.b16 %v267, %v265
    %v314 = vpack.c.b16 %v270, %v268
    %v315 = vpack.c.b16 %v271, %v269
    %v316 = vpack.c.b16 %v274, %v272
    %v317 = vpack.c.b16 %v275, %v273
    %v318 = vpack.c.b16 %v278, %v276
    %v319 = vpack.c.b16 %v279, %v277
    %v320 = vpack.c.b16 %v282, %v280
    %v321 = vpack.c.b16 %v283, %v281
    %v322 = vpack.c.b16 %v286, %v284
    %v323 = vpack.c.b16 %v287, %v285
    %v324 = vpack.c.b16 %v290, %v288
    %v325 = vpack.c.b16 %v291, %v289
    %v326 = vpack.c.b16 %v294, %v292
    %v327 = vpack.c.b16 %v295, %v293
    %360 = vmatprep.subr.bf16.mxu0 %v297
    %361 = vmatpush1.bf16.msra.mxu0 %v296
    %362 = vmatprep.subr.bf16.mxu0 %v299
    %363 = vmatpush1.bf16.msra.mxu0 %v298
    %364 = vmatprep.subr.bf16.mxu0 %v301
    %365 = vmatpush1.bf16.msra.mxu0 %v300
    %366 = vmatprep.subr.bf16.mxu0 %v303
    %367 = vmatpush1.bf16.msra.mxu0 %v302
    %368 = vmatprep.subr.bf16.mxu0 %v305
    %369 = vmatpush1.bf16.msra.mxu0 %v304
    %370 = vmatprep.subr.bf16.mxu0 %v307
    %371 = vmatpush1.bf16.msra.mxu0 %v306
    %372 = vmatprep.subr.bf16.mxu0 %v309
    %373 = vmatpush1.bf16.msra.mxu0 %v308
    %374 = vmatprep.subr.bf16.mxu0 %v311
    %375 = vmatpush1.bf16.msra.mxu0 %v310
    %376 = vmatprep.subr.bf16.mxu0 %v313
    %377 = vmatpush1.bf16.msra.mxu0 %v312
    %378 = vmatprep.subr.bf16.mxu0 %v315
    %379 = vmatpush1.bf16.msra.mxu0 %v314
    %380 = vmatprep.subr.bf16.mxu0 %v317
    %381 = vmatpush1.bf16.msra.mxu0 %v316
    %382 = vmatprep.subr.bf16.mxu0 %v319
    %383 = vmatpush1.bf16.msra.mxu0 %v318
    %384 = vmatprep.subr.bf16.mxu0 %v321
    %385 = vmatpush1.bf16.msra.mxu0 %v320
    %386 = vmatprep.subr.bf16.mxu0 %v323
    %387 = vmatpush1.bf16.msra.mxu0 %v322
    %388 = vmatprep.subr.bf16.mxu0 %v325
    %389 = vmatpush1.bf16.msra.mxu0 %v324
    %390 = vmatprep.subr.bf16.mxu0 %v327
    %391 = vmatpush1.bf16.msra.mxu0 %v326
    %392 = vmatprep.mubr.bf16.mxu0 %v155
    %393 = vmatmul.mubr.bf16.gmra.mrb[0].mxu0 %v154
    %v394 = vpop.f32.mrb[0].mxu0
    %v395 = vadd.f32 %v193, %v394
    %v396 = vpop.f32.mrb[0].mxu0
    %v397 = vadd.f32 %v197, %v396
    %v398 = vpop.f32.mrb[0].mxu0
    %v399 = vpop.f32.mrb[0].mxu0
    %400 = vdwg.mxu0
    %v401 = vmax.f32 %v395, 0.0
    %v402 = vmax.f32 %v397, 0.0
    %v403 = vpack.c.bf16 %v401, %v401
    %v404 = vpack.c.bf16 %v402, %v402
    %v405 = vld [vmem:[#allocation8] sm:$0xf]
    %v406 = vld [vmem:[#allocation8 + $0x4] sm:$0xf]
    %v407 = vld [vmem:[#allocation8 + $0x8] sm:$0xf]
    %v408 = vld [vmem:[#allocation8 + $0xc] sm:$0xf]
    %v409 = vld [vmem:[#allocation8 + $0x10] sm:$0xf]
    %v410 = vld [vmem:[#allocation8 + $0x14] sm:$0xf]
    %v411 = vld [vmem:[#allocation8 + $0x18] sm:$0xf]
    %v412 = vld [vmem:[#allocation8 + $0x1c] sm:$0xf]
    %v413 = vld [vmem:[#allocation8 + $0x20] sm:$0xf]
    %v414 = vld [vmem:[#allocation8 + $0x24] sm:$0xf]
    %v415 = vld [vmem:[#allocation8 + $0x28] sm:$0xf]
    %v416 = vld [vmem:[#allocation8 + $0x2c] sm:$0xf]
    %v417 = vld [vmem:[#allocation8 + $0x30] sm:$0xf]
    %v418 = vld [vmem:[#allocation8 + $0x34] sm:$0xf]
    %v419 = vld [vmem:[#allocation8 + $0x38] sm:$0xf]
    %v420 = vld [vmem:[#allocation8 + $0x3c] sm:$0xf]
    %v421 = vld [vmem:[#allocation8 + $0x40] sm:$0xf]
    %v422 = vld [vmem:[#allocation8 + $0x44] sm:$0xf]
    %v423 = vld [vmem:[#allocation8 + $0x48] sm:$0xf]
    %v424 = vld [vmem:[#allocation8 + $0x4c] sm:$0xf]
    %v425 = vld [vmem:[#allocation8 + $0x50] sm:$0xf]
    %v426 = vld [vmem:[#allocation8 + $0x54] sm:$0xf]
    %v427 = vld [vmem:[#allocation8 + $0x58] sm:$0xf]
    %v428 = vld [vmem:[#allocation8 + $0x5c] sm:$0xf]
    %v429 = vld [vmem:[#allocation8 + $0x60] sm:$0xf]
    %v430 = vld [vmem:[#allocation8 + $0x64] sm:$0xf]
    %v431 = vld [vmem:[#allocation8 + $0x68] sm:$0xf]
    %v432 = vld [vmem:[#allocation8 + $0x6c] sm:$0xf]
    %v433 = vld [vmem:[#allocation8 + $0x70] sm:$0xf]
    %v434 = vld [vmem:[#allocation8 + $0x74] sm:$0xf]
    %v435 = vld [vmem:[#allocation8 + $0x78] sm:$0xf]
    %v436 = vld [vmem:[#allocation8 + $0x7c] sm:$0xf]
    %v437 = vld [vmem:[%s6] sm:$0x1]
    %v439 = vlaneseq
    %v440 = vshrl.u32 %v439, 7
    %v441 = vsub.s32 0, %v440
    %v442 = vrot.slane %v437, %v441
    %v476 = vunpack.c.l.b16 %v405
    %v477 = vunpack.c.l.b16 %v406
    %v478 = vunpack.c.l.b16 %v407
    %v479 = vunpack.c.l.b16 %v408
    %v480 = vunpack.c.l.b16 %v409
    %v481 = vunpack.c.l.b16 %v410
    %v482 = vunpack.c.l.b16 %v411
    %v483 = vunpack.c.l.b16 %v412
    %v484 = vunpack.c.l.b16 %v413
    %v485 = vunpack.c.l.b16 %v414
    %v486 = vunpack.c.l.b16 %v415
    %v487 = vunpack.c.l.b16 %v416
    %v488 = vunpack.c.l.b16 %v417
    %v489 = vunpack.c.l.b16 %v418
    %v490 = vunpack.c.l.b16 %v419
    %v491 = vunpack.c.l.b16 %v420
    %v492 = vunpack.c.l.b16 %v421
    %v493 = vunpack.c.l.b16 %v422
    %v494 = vunpack.c.l.b16 %v423
    %v495 = vunpack.c.l.b16 %v424
    %v496 = vunpack.c.l.b16 %v425
    %v497 = vunpack.c.l.b16 %v426
    %v498 = vunpack.c.l.b16 %v427
    %v499 = vunpack.c.l.b16 %v428
    %v500 = vunpack.c.l.b16 %v429
    %v501 = vunpack.c.l.b16 %v430
    %v502 = vunpack.c.l.b16 %v431
    %v503 = vunpack.c.l.b16 %v432
    %v504 = vunpack.c.l.b16 %v433
    %v505 = vunpack.c.l.b16 %v434
    %v506 = vunpack.c.l.b16 %v435
    %v507 = vunpack.c.l.b16 %v436
    %v508 = vpack.c.b16 %v477, %v476
    %v509 = vpack.c.b16 %v479, %v478
    %v510 = vpack.c.b16 %v481, %v480
    %v511 = vpack.c.b16 %v483, %v482
    %v512 = vpack.c.b16 %v485, %v484
    %v513 = vpack.c.b16 %v487, %v486
    %v514 = vpack.c.b16 %v489, %v488
    %v515 = vpack.c.b16 %v491, %v490
    %v516 = vpack.c.b16 %v493, %v492
    %v517 = vpack.c.b16 %v495, %v494
    %v518 = vpack.c.b16 %v497, %v496
    %v519 = vpack.c.b16 %v499, %v498
    %v520 = vpack.c.b16 %v501, %v500
    %v521 = vpack.c.b16 %v503, %v502
    %v522 = vpack.c.b16 %v505, %v504
    %v523 = vpack.c.b16 %v507, %v506
    %540 = vmatprep.subr.bf16.mxu0 0
    %541 = vmatpush1.bf16.msra.mxu0 %v508
    %542 = vmatprep.subr.bf16.mxu0 0
    %543 = vmatpush1.bf16.msra.mxu0 %v509
    %544 = vmatprep.subr.bf16.mxu0 0
    %545 = vmatpush1.bf16.msra.mxu0 %v510
    %546 = vmatprep.subr.bf16.mxu0 0
    %547 = vmatpush1.bf16.msra.mxu0 %v511
    %548 = vmatprep.subr.bf16.mxu0 0
    %549 = vmatpush1.bf16.msra.mxu0 %v512
    %550 = vmatprep.subr.bf16.mxu0 0
    %551 = vmatpush1.bf16.msra.mxu0 %v513
    %552 = vmatprep.subr.bf16.mxu0 0
    %553 = vmatpush1.bf16.msra.mxu0 %v514
    %554 = vmatprep.subr.bf16.mxu0 0
    %555 = vmatpush1.bf16.msra.mxu0 %v515
    %556 = vmatprep.subr.bf16.mxu0 0
    %557 = vmatpush1.bf16.msra.mxu0 %v516
    %558 = vmatprep.subr.bf16.mxu0 0
    %559 = vmatpush1.bf16.msra.mxu0 %v517
    %560 = vmatprep.subr.bf16.mxu0 0
    %561 = vmatpush1.bf16.msra.mxu0 %v518
    %562 = vmatprep.subr.bf16.mxu0 0
    %563 = vmatpush1.bf16.msra.mxu0 %v519
    %564 = vmatprep.subr.bf16.mxu0 0
    %565 = vmatpush1.bf16.msra.mxu0 %v520
    %566 = vmatprep.subr.bf16.mxu0 0
    %567 = vmatpush1.bf16.msra.mxu0 %v521
    %568 = vmatprep.subr.bf16.mxu0 0
    %569 = vmatpush1.bf16.msra.mxu0 %v522
    %570 = vmatprep.subr.bf16.mxu0 0
    %571 = vmatpush1.bf16.msra.mxu0 %v523
    %572 = vmatprep.mubr.bf16.mxu0 %v404
    %573 = vmatmul.mubr.bf16.gmra.mrb[0].mxu0 %v403
    %v574 = vpop.f32.mrb[0].mxu0
    %v575 = vadd.f32 %v442, %v574
    %v576 = vpop.f32.mrb[0].mxu0
    %v577 = vpop.f32.mrb[0].mxu0
    %v578 = vpop.f32.mrb[0].mxu0
    %579 = vdwg.mxu0
    %v580 = vlaneseq
    %v581 = vand.u32 %v580, 127
    %vm582 = vcmp.ge.s32.totalorder %v581, 4
    %vm583 = vcmp.lt.s32.totalorder %v581, 8
    %vm584 = vmand %vm582, %vm583
    %v585 = vmax.f32 %v575, -20.0
    %v586 = vmin.f32 %v585, 2.0
    %v587 = vsel %vm584, %v586, %v575
    %v588 = vpack.c.bf16 %v587, %v587
    %589 = vst [vmem:[#allocation10] sm:$0xf] %v588
    // Predicated region
    $region46: #{tpu_custom_call.1} parent=1 // pred_check
      _
    $region47: #{tpu_custom_call.1} parent=1 // pred_check_branch
      %591 = sbr.rel (0) target = $region49
    $region48: #{tpu_custom_call.1} parent=1 // pred_region
      %s593 = ssub.s32 64, 64
      %594 = vsyncadd [#allocation4], %s593
      %s596 = sshll.u32 [#allocation10], 4
      %s597 = int_to_ptr.vmem [resolvable:$true] %s596
      %599 = dma.vmem_to_hbm [thread:$0]  %s597, 64, %s7, [#allocation4]
    $region49: #{tpu_custom_call.1} parent=1 // pred_fallthru
      _
    // Predicated region
    $region50: #{tpu_custom_call.1} parent=1 // pred_check
      _
    $region51: #{tpu_custom_call.1} parent=1 // pred_check_branch
      %601 = sbr.rel (0) target = $region53
    $region52: #{tpu_custom_call.1} parent=1 // pred_region
      %602 = dma.done [#allocation4], 64
    $region53: #{tpu_custom_call.1} parent=1 // pred_fallthru
      _
    %603 = vsyncpa [#allocation3], 1
    %604 = vsyncpa [#allocation6], 1
    %605 = vsyncpa [#allocation9], 1
    %606 = vsyncpa [#allocation4], 1

</llo_original>
